<compile_context>
chip_gen: v5e
topology: v5e:2x2
jax: 0.10.0
libtpu: 0.0.40
codegen_flags: <defaults>
</compile_context>

<pallas_src>
import functools

import jax
import jax.numpy as jnp
from jax.experimental import pallas as pl
from jax.experimental.pallas import tpu as pltpu

T_DEFAULT = 3.0

_MAX_TILE_B = 4096        # rows per batch tile, upper cap
_MAX_RESIDENT_C = 8192    # keep the whole class axis per tile below this
_CLASS_TILE = 4096        # class chunk (multiple of 128) above it
_F32_TEMPS = 6            # headroom: live (tb, tc) f32 temporaries in the body


def _cdiv(a, b):
    return -(-a // b)


def _round_up(x, m):
    return _cdiv(x, m) * m


def _sublane_pack(itemsize):
    # f32 -> 8, bf16 -> 16, int8/fp8 -> 32 (sub-32-bit dtypes pack along sublanes).
    return 8 * (4 // itemsize) if itemsize in (1, 2, 4) else 8


def _vmem_capacity_bytes():
    """Generation-aware VMEM capacity; conservative 64 MiB (v7x) fallback."""
    try:
        cap = int(getattr(pltpu.get_tpu_info(), "vmem_capacity_bytes"))
        if cap > 0:
            return cap
    except Exception:
        pass
    return 64 * 1024 * 1024


def _kl_kernel(s_ref, t_ref, o_ref, m_t, z_t, acc, m_s, l_s, *, inv_T, C, tc):
    """One (tb, tc) tile of student/teacher logits; online softmax over class tiles."""
    j = pl.program_id(1)
    nc = pl.num_programs(1)

    @pl.when(j == 0)
    def _():
        m_t[...] = jnp.full_like(m_t, -jnp.inf)
        m_s[...] = jnp.full_like(m_s, -jnp.inf)
        z_t[...] = jnp.zeros_like(z_t)
        l_s[...] = jnp.zeros_like(l_s)
        acc[...] = jnp.zeros_like(acc)

    # Upcast in-register; 1/T is a multiply, never a divide.
    s = s_ref[...].astype(jnp.float32) * inv_T
    t = t_ref[...].astype(jnp.float32) * inv_T

    if C % tc != 0:
        # Ragged class tail: mask out-of-range columns (static specialization).
        col = jax.lax.broadcasted_iota(jnp.int32, s.shape, 1) + j * tc
        valid = col < C
        neg = jnp.float32(-1e30)
        s_m = jnp.where(valid, s, neg)
        t_m = jnp.where(valid, t, neg)
    else:
        valid = None
        s_m, t_m = s, t

    # Teacher: running max / normalizer / cross-term  sum_c exp(t - m_t) * s.
    m_t_new = jnp.maximum(m_t[...], jnp.max(t_m, axis=1, keepdims=True))
    alpha_t = jnp.exp(m_t[...] - m_t_new)
    t_exp = jnp.exp(t_m - m_t_new)
    prod = t_exp * s
    if valid is not None:
        prod = jnp.where(valid, prod, 0.0)
    z_t[...] = z_t[...] * alpha_t + jnp.sum(t_exp, axis=1, keepdims=True)
    acc[...] = acc[...] * alpha_t + jnp.sum(prod, axis=1, keepdims=True)
    m_t[...] = m_t_new

    # Student: running logsumexp (log Z_s = m_s + log l_s at the end).
    m_s_new = jnp.maximum(m_s[...], jnp.max(s_m, axis=1, keepdims=True))
    alpha_s = jnp.exp(m_s[...] - m_s_new)
    l_s[...] = l_s[...] * alpha_s + jnp.sum(jnp.exp(s_m - m_s_new), axis=1, keepdims=True)
    m_s[...] = m_s_new

    @pl.when(j == nc - 1)
    def _():
        # sum_c p_t * log_softmax(s)_c = acc / Z_t - (m_s + log l_s)  (sum_c p_t == 1)
        # Exact reciprocal: one per row per kernel at finalize -> negligible either way,
        # and keeps the correctness assert tight.
        if hasattr(pl, "reciprocal"):
            pt_dot_s = acc[...] * pl.reciprocal(z_t[...], approx=False)
        else:
            pt_dot_s = acc[...] / z_t[...]
        o_ref[...] = pt_dot_s - (m_s[...] + jnp.log(l_s[...]))


def kl_loss(logit_s, logit_t, T=T_DEFAULT, tile_b=None, tile_c=None):
    """Pallas implementation of KLLoss.forward. Inputs are (B, C) logits."""
    assert logit_s.shape == logit_t.shape and logit_s.ndim == 2
    B, C = logit_s.shape
    itemsize = jnp.dtype(logit_s.dtype).itemsize
    pack = _sublane_pack(itemsize)

    vmem_cap = _vmem_capacity_bytes()
    budget = (vmem_cap * 3) // 4          # leave headroom for Mosaic internals

    # Class tile: whole axis when it fits; 128-aligned chunks otherwise.
    if tile_c is None:
        tc = C if C <= _MAX_RESIDENT_C else _CLASS_TILE
    else:
        tc = int(tile_c)
        assert tc == C or tc % 128 == 0, "tile_c must equal C or be a multiple of 128"
    num_c = _cdiv(C, tc)

    # Batch tile: fill the VMEM budget (2 inputs x 2 pipeline buffers + f32 temps),
    # but keep >= 4 batch tiles when B allows (DMA/compute overlap, v7x megacore).
    bytes_per_row = tc * (4 * itemsize + 4 * _F32_TEMPS)
    if tile_b is None:
        tb = max(pack, (budget // bytes_per_row) // pack * pack)
        tb = min(tb, _MAX_TILE_B)
        tb = min(tb, max(pack, _round_up(_cdiv(B, 4), pack)))
    else:
        tb = int(tile_b)
    assert tb > 0 and tb % pack == 0, "tile_b must be a multiple of the sublane pack"
    num_b = _cdiv(B, tb)

    # Declared VMEM limit: estimated use + slack, clamped to physical capacity.
    est = 4 * tb * tc * itemsize + _F32_TEMPS * tb * tc * 4 + (4 << 20)
    vmem_limit = int(min(vmem_cap, max(est, 32 * 1024 * 1024)))

    kernel = functools.partial(_kl_kernel, inv_T=float(1.0 / T), C=C, tc=tc)

    call_kwargs = {}
    if hasattr(pl, "CostEstimate"):
        call_kwargs["cost_estimate"] = pl.CostEstimate(
            flops=int(14 * B * C),
            transcendentals=int(2 * B * C + 4 * B),
            bytes_accessed=int(2 * B * C * itemsize + 4 * B),
        )

    per_row = pl.pallas_call(
        kernel,
        grid=(num_b, num_c),
        out_shape=jax.ShapeDtypeStruct((B, 1), jnp.float32),
        in_specs=[
            pl.BlockSpec((tb, tc), lambda i, j: (i, j)),
            pl.BlockSpec((tb, tc), lambda i, j: (i, j)),
        ],
        out_specs=pl.BlockSpec((tb, 1), lambda i, j: (i, 0)),
        scratch_shapes=[pltpu.VMEM((tb, 1), jnp.float32)] * 5,
        compiler_params=pltpu.CompilerParams(
            dimension_semantics=("parallel", "arbitrary"),
            vmem_limit_bytes=vmem_limit,
        ),
        **call_kwargs,
    )(logit_s, logit_t)

    # Finalize on the tiny (B,) vector: exact mean, then -T^2 scale.
    return -(T * T) * jnp.mean(per_row[:, 0])


def _kl_loss_ref(logit_s, logit_t, T=T_DEFAULT):
    # Pure-JAX reference for correctness checking.
    p_s = jax.nn.log_softmax(logit_s.astype(jnp.float32) / T, axis=1)
    p_t = jax.nn.softmax(logit_t.astype(jnp.float32) / T, axis=1)
    return -(T ** 2) * jnp.mean(jnp.sum(p_s * p_t, axis=1))


if __name__ == "__main__":
    key = jax.random.PRNGKey(0)
    k1, k2, k3, k4, k5, k6 = jax.random.split(key, 6)

    # Small shapes consistent with the module: logits are (batch, classes).
    B, C = 8, 32
    ls = jax.random.normal(k1, (B, C), dtype=jnp.float32)
    lt = jax.random.normal(k2, (B, C), dtype=jnp.float32)
    loss = jax.block_until_ready(kl_loss(ls, lt))
    ref = jax.block_until_ready(_kl_loss_ref(ls, lt))
    assert jnp.allclose(loss, ref, rtol=2e-4, atol=1e-4), (loss, ref)

    # Ragged batch (edge blocks, no jnp.pad) + class-axis tiling with tail masking.
    B2, C2 = 50, 160
    ls2 = jax.random.normal(k3, (B2, C2), dtype=jnp.float32)
    lt2 = jax.random.normal(k4, (B2, C2), dtype=jnp.float32)
    loss2 = jax.block_until_ready(kl_loss(ls2, lt2, tile_b=16, tile_c=128))
    ref2 = jax.block_until_ready(_kl_loss_ref(ls2, lt2))
    assert jnp.allclose(loss2, ref2, rtol=2e-4, atol=1e-4), (loss2, ref2)

    # bf16-on-the-wire callers: dtype-aware sublane pack (16) + upcast in-kernel.
    B3, C3 = 24, 48
    ls3 = jax.random.normal(k5, (B3, C3), dtype=jnp.float32).astype(jnp.bfloat16)
    lt3 = jax.random.normal(k6, (B3, C3), dtype=jnp.float32).astype(jnp.bfloat16)
    loss3 = jax.block_until_ready(kl_loss(ls3, lt3))
    ref3 = jax.block_until_ready(_kl_loss_ref(ls3, lt3))
    assert jnp.allclose(loss3, ref3, rtol=1e-3, atol=1e-3), (loss3, ref3)

    print("KERNEL_OK")
</pallas_src>

<mosaic_0001>
module attributes {stable_mosaic.version = 11 : i64} {
  func.func @_kl_kernel(%arg0: i32, %arg1: i32, %arg2: memref<8x32xf32, #tpu.memory_space<vmem>>, %arg3: memref<8x32xf32, #tpu.memory_space<vmem>>, %arg4: memref<8x1xf32, #tpu.memory_space<vmem>>, %arg5: memref<8x1xf32, #tpu.memory_space<vmem>>, %arg6: memref<8x1xf32, #tpu.memory_space<vmem>>, %arg7: memref<8x1xf32, #tpu.memory_space<vmem>>, %arg8: memref<8x1xf32, #tpu.memory_space<vmem>>, %arg9: memref<8x1xf32, #tpu.memory_space<vmem>>) attributes {dimension_semantics = [#tpu.dimension_semantics<parallel>, #tpu.dimension_semantics<arbitrary>], iteration_bounds = array<i64: 1, 1>, scalar_prefetch = 0 : i64, scratch_operands = 5 : i64, tpu.core_type = #tpu.core_type<tc>, window_params = [{transform_indices = @transform_0, window_bounds = array<i64: 8, 32>}, {transform_indices = @transform_1, window_bounds = array<i64: 8, 32>}, {transform_indices = @transform_2, window_bounds = array<i64: 8, 1>}]} {
    %c0_i32 = arith.constant 0 : i32
    %0 = arith.cmpi eq, %arg1, %c0_i32 : i32
    %1 = arith.extui %0 : i1 to i32
    %c0_i32_0 = arith.constant 0 : i32
    %2 = arith.cmpi ne, %1, %c0_i32_0 : i32
    scf.if %2 {
      %cst_36 = arith.constant 0xFF800000 : f32
      %53 = vector.broadcast %cst_36 : f32 to vector<8x1xf32>
      %c0_37 = arith.constant 0 : index
      %c0_38 = arith.constant 0 : index
      %54 = vector.load %arg5[%c0_37, %c0_38] : memref<8x1xf32, #tpu.memory_space<vmem>>, vector<8x1xf32>
      tpu.vector_store %arg5[%c0_37, %c0_38], %53 {strides = array<i32>} : memref<8x1xf32, #tpu.memory_space<vmem>>, vector<8x1xf32>,
      %cst_39 = arith.constant 0xFF800000 : f32
      %55 = vector.broadcast %cst_39 : f32 to vector<8x1xf32>
      %c0_40 = arith.constant 0 : index
      %c0_41 = arith.constant 0 : index
      %56 = vector.load %arg8[%c0_40, %c0_41] : memref<8x1xf32, #tpu.memory_space<vmem>>, vector<8x1xf32>
      tpu.vector_store %arg8[%c0_40, %c0_41], %55 {strides = array<i32>} : memref<8x1xf32, #tpu.memory_space<vmem>>, vector<8x1xf32>,
      %cst_42 = arith.constant 0.000000e+00 : f32
      %57 = vector.broadcast %cst_42 : f32 to vector<8x1xf32>
      %c0_43 = arith.constant 0 : index
      %c0_44 = arith.constant 0 : index
      %58 = vector.load %arg6[%c0_43, %c0_44] : memref<8x1xf32, #tpu.memory_space<vmem>>, vector<8x1xf32>
      tpu.vector_store %arg6[%c0_43, %c0_44], %57 {strides = array<i32>} : memref<8x1xf32, #tpu.memory_space<vmem>>, vector<8x1xf32>,
      %cst_45 = arith.constant 0.000000e+00 : f32
      %59 = vector.broadcast %cst_45 : f32 to vector<8x1xf32>
      %c0_46 = arith.constant 0 : index
      %c0_47 = arith.constant 0 : index
      %60 = vector.load %arg9[%c0_46, %c0_47] : memref<8x1xf32, #tpu.memory_space<vmem>>, vector<8x1xf32>
      tpu.vector_store %arg9[%c0_46, %c0_47], %59 {strides = array<i32>} : memref<8x1xf32, #tpu.memory_space<vmem>>, vector<8x1xf32>,
      %cst_48 = arith.constant 0.000000e+00 : f32
      %61 = vector.broadcast %cst_48 : f32 to vector<8x1xf32>
      %c0_49 = arith.constant 0 : index
      %c0_50 = arith.constant 0 : index
      %62 = vector.load %arg7[%c0_49, %c0_50] : memref<8x1xf32, #tpu.memory_space<vmem>>, vector<8x1xf32>
      tpu.vector_store %arg7[%c0_49, %c0_50], %61 {strides = array<i32>} : memref<8x1xf32, #tpu.memory_space<vmem>>, vector<8x1xf32>,
    } else {
    }
    %c0 = arith.constant 0 : index
    %c0_1 = arith.constant 0 : index
    %3 = vector.load %arg2[%c0, %c0_1] : memref<8x32xf32, #tpu.memory_space<vmem>>, vector<8x32xf32>
    %cst = arith.constant 0.333333343 : f32
    %4 = vector.broadcast %cst : f32 to vector<8x32xf32>
    %5 = arith.mulf %3, %4 : vector<8x32xf32>
    %c0_2 = arith.constant 0 : index
    %c0_3 = arith.constant 0 : index
    %6 = vector.load %arg3[%c0_2, %c0_3] : memref<8x32xf32, #tpu.memory_space<vmem>>, vector<8x32xf32>
    %cst_4 = arith.constant 0.333333343 : f32
    %7 = vector.broadcast %cst_4 : f32 to vector<8x32xf32>
    %8 = arith.mulf %6, %7 : vector<8x32xf32>
    %c0_5 = arith.constant 0 : index
    %c0_6 = arith.constant 0 : index
    %9 = vector.load %arg5[%c0_5, %c0_6] : memref<8x1xf32, #tpu.memory_space<vmem>>, vector<8x1xf32>
    %cst_7 = arith.constant dense<0xFF800000> : vector<8xf32>
    %10 = vector.multi_reduction <maximumf>, %8, %cst_7 [1] : vector<8x32xf32> to vector<8xf32>
    %11 = vector.shape_cast %10 : vector<8xf32> to vector<8x1xf32>
    %12 = arith.maximumf %9, %11 : vector<8x1xf32>
    %c0_8 = arith.constant 0 : index
    %c0_9 = arith.constant 0 : index
    %13 = vector.load %arg5[%c0_8, %c0_9] : memref<8x1xf32, #tpu.memory_space<vmem>>, vector<8x1xf32>
    %14 = arith.subf %13, %12 : vector<8x1xf32>
    %15 = math.exp %14 : vector<8x1xf32>
    %16 = vector.broadcast %12 : vector<8x1xf32> to vector<8x32xf32>
    %17 = arith.subf %8, %16 : vector<8x32xf32>
    %18 = math.exp %17 : vector<8x32xf32>
    %19 = arith.mulf %18, %5 : vector<8x32xf32>
    %c0_10 = arith.constant 0 : index
    %c0_11 = arith.constant 0 : index
    %20 = vector.load %arg6[%c0_10, %c0_11] : memref<8x1xf32, #tpu.memory_space<vmem>>, vector<8x1xf32>
    %21 = arith.mulf %20, %15 : vector<8x1xf32>
    %cst_12 = arith.constant dense<0.000000e+00> : vector<8xf32>
    %22 = vector.multi_reduction <add>, %18, %cst_12 [1] : vector<8x32xf32> to vector<8xf32>
    %23 = vector.shape_cast %22 : vector<8xf32> to vector<8x1xf32>
    %24 = arith.addf %21, %23 : vector<8x1xf32>
    %c0_13 = arith.constant 0 : index
    %c0_14 = arith.constant 0 : index
    %25 = vector.load %arg6[%c0_13, %c0_14] : memref<8x1xf32, #tpu.memory_space<vmem>>, vector<8x1xf32>
    tpu.vector_store %arg6[%c0_13, %c0_14], %24 {strides = array<i32>} : memref<8x1xf32, #tpu.memory_space<vmem>>, vector<8x1xf32>,
    %c0_15 = arith.constant 0 : index
    %c0_16 = arith.constant 0 : index
    %26 = vector.load %arg7[%c0_15, %c0_16] : memref<8x1xf32, #tpu.memory_space<vmem>>, vector<8x1xf32>
    %27 = arith.mulf %26, %15 : vector<8x1xf32>
    %cst_17 = arith.constant dense<0.000000e+00> : vector<8xf32>
    %28 = vector.multi_reduction <add>, %19, %cst_17 [1] : vector<8x32xf32> to vector<8xf32>
    %29 = vector.shape_cast %28 : vector<8xf32> to vector<8x1xf32>
    %30 = arith.addf %27, %29 : vector<8x1xf32>
    %c0_18 = arith.constant 0 : index
    %c0_19 = arith.constant 0 : index
    %31 = vector.load %arg7[%c0_18, %c0_19] : memref<8x1xf32, #tpu.memory_space<vmem>>, vector<8x1xf32>
    tpu.vector_store %arg7[%c0_18, %c0_19], %30 {strides = array<i32>} : memref<8x1xf32, #tpu.memory_space<vmem>>, vector<8x1xf32>,
    %c0_20 = arith.constant 0 : index
    %c0_21 = arith.constant 0 : index
    %32 = vector.load %arg5[%c0_20, %c0_21] : memref<8x1xf32, #tpu.memory_space<vmem>>, vector<8x1xf32>
    tpu.vector_store %arg5[%c0_20, %c0_21], %12 {strides = array<i32>} : memref<8x1xf32, #tpu.memory_space<vmem>>, vector<8x1xf32>,
    %c0_22 = arith.constant 0 : index
    %c0_23 = arith.constant 0 : index
    %33 = vector.load %arg8[%c0_22, %c0_23] : memref<8x1xf32, #tpu.memory_space<vmem>>, vector<8x1xf32>
    %cst_24 = arith.constant dense<0xFF800000> : vector<8xf32>
    %34 = vector.multi_reduction <maximumf>, %5, %cst_24 [1] : vector<8x32xf32> to vector<8xf32>
    %35 = vector.shape_cast %34 : vector<8xf32> to vector<8x1xf32>
    %36 = arith.maximumf %33, %35 : vector<8x1xf32>
    %c0_25 = arith.constant 0 : index
    %c0_26 = arith.constant 0 : index
    %37 = vector.load %arg8[%c0_25, %c0_26] : memref<8x1xf32, #tpu.memory_space<vmem>>, vector<8x1xf32>
    %38 = arith.subf %37, %36 : vector<8x1xf32>
    %39 = math.exp %38 : vector<8x1xf32>
    %c0_27 = arith.constant 0 : index
    %c0_28 = arith.constant 0 : index
    %40 = vector.load %arg9[%c0_27, %c0_28] : memref<8x1xf32, #tpu.memory_space<vmem>>, vector<8x1xf32>
    %41 = arith.mulf %40, %39 : vector<8x1xf32>
    %42 = vector.broadcast %36 : vector<8x1xf32> to vector<8x32xf32>
    %43 = arith.subf %5, %42 : vector<8x32xf32>
    %44 = math.exp %43 : vector<8x32xf32>
    %cst_29 = arith.constant dense<0.000000e+00> : vector<8xf32>
    %45 = vector.multi_reduction <add>, %44, %cst_29 [1] : vector<8x32xf32> to vector<8xf32>
    %46 = vector.shape_cast %45 : vector<8xf32> to vector<8x1xf32>
    %47 = arith.addf %41, %46 : vector<8x1xf32>
    %c0_30 = arith.constant 0 : index
    %c0_31 = arith.constant 0 : index
    %48 = vector.load %arg9[%c0_30, %c0_31] : memref<8x1xf32, #tpu.memory_space<vmem>>, vector<8x1xf32>
    tpu.vector_store %arg9[%c0_30, %c0_31], %47 {strides = array<i32>} : memref<8x1xf32, #tpu.memory_space<vmem>>, vector<8x1xf32>,
    %c0_32 = arith.constant 0 : index
    %c0_33 = arith.constant 0 : index
    %49 = vector.load %arg8[%c0_32, %c0_33] : memref<8x1xf32, #tpu.memory_space<vmem>>, vector<8x1xf32>
    tpu.vector_store %arg8[%c0_32, %c0_33], %36 {strides = array<i32>} : memref<8x1xf32, #tpu.memory_space<vmem>>, vector<8x1xf32>,
    %c0_i32_34 = arith.constant 0 : i32
    %50 = arith.cmpi eq, %arg1, %c0_i32_34 : i32
    %51 = arith.extui %50 : i1 to i32
    %c0_i32_35 = arith.constant 0 : i32
    %52 = arith.cmpi ne, %51, %c0_i32_35 : i32
    scf.if %52 {
      %c0_36 = arith.constant 0 : index
      %c0_37 = arith.constant 0 : index
      %53 = vector.load %arg7[%c0_36, %c0_37] : memref<8x1xf32, #tpu.memory_space<vmem>>, vector<8x1xf32>
      %c0_38 = arith.constant 0 : index
      %c0_39 = arith.constant 0 : index
      %54 = vector.load %arg6[%c0_38, %c0_39] : memref<8x1xf32, #tpu.memory_space<vmem>>, vector<8x1xf32>
      %55 = tpu.reciprocal %54 : vector<8x1xf32> -> vector<8x1xf32>
      %56 = arith.mulf %53, %55 : vector<8x1xf32>
      %c0_40 = arith.constant 0 : index
      %c0_41 = arith.constant 0 : index
      %57 = vector.load %arg8[%c0_40, %c0_41] : memref<8x1xf32, #tpu.memory_space<vmem>>, vector<8x1xf32>
      %c0_42 = arith.constant 0 : index
      %c0_43 = arith.constant 0 : index
      %58 = vector.load %arg9[%c0_42, %c0_43] : memref<8x1xf32, #tpu.memory_space<vmem>>, vector<8x1xf32>
      %59 = math.log %58 : vector<8x1xf32>
      %60 = arith.addf %57, %59 : vector<8x1xf32>
      %61 = arith.subf %56, %60 : vector<8x1xf32>
      %c0_44 = arith.constant 0 : index
      %c0_45 = arith.constant 0 : index
      %62 = vector.load %arg4[%c0_44, %c0_45] : memref<8x1xf32, #tpu.memory_space<vmem>>, vector<8x1xf32>
      tpu.vector_store %arg4[%c0_44, %c0_45], %61 {strides = array<i32>} : memref<8x1xf32, #tpu.memory_space<vmem>>, vector<8x1xf32>,
    } else {
    }
    return
  }
  func.func @transform_0(%arg0: i32, %arg1: i32) -> (i32, i32) {
    %c0_i32 = arith.constant 0 : i32
    return %arg0, %arg1 : i32, i32
  }
  func.func @transform_1(%arg0: i32, %arg1: i32) -> (i32, i32) {
    %c0_i32 = arith.constant 0 : i32
    return %arg0, %arg1 : i32, i32
  }
  func.func @transform_2(%arg0: i32, %arg1: i32) -> (i32, i32) {
    %c0_i32 = arith.constant 0 : i32
    %c0_i32_0 = arith.constant 0 : i32
    return %arg0, %c0_i32 : i32, i32
  }
}

</mosaic_0001>

<llo_original>
// kernel: tpu_custom_call.1
$region0: #{tpu_custom_call.1}
  #allocation0 [shape = 'u32[]', space=smem, size = 0x4, offset = 0x4, fixed_abs, tag = 'smem constant byte address 0x4 - core index']
  #allocation1 [shape = 'u32[72,128]{1,0:T(1,128)}', space=vmem, size = 0x9000, scoped, tag = 'internal scratch']
  #allocation2 [shape = 'f32[8,1]{1,0:T(8,128)}', space=vmem, size = 0x1000, scoped, tag = 'scratch operand']
  #allocation3 [shape = 'f32[8,1]{1,0:T(8,128)}', space=vmem, size = 0x1000, scoped, tag = 'scratch operand']
  #allocation4 [shape = 'f32[8,1]{1,0:T(8,128)}', space=vmem, size = 0x1000, scoped, tag = 'scratch operand']
  #allocation5 [shape = 'f32[8,1]{1,0:T(8,128)}', space=vmem, size = 0x1000, scoped, tag = 'scratch operand']
  #allocation6 [shape = 'f32[8,1]{1,0:T(8,128)}', space=vmem, size = 0x1000, scoped, tag = 'scratch operand']
  %s0 = inlined_call_operand.hbm [shape: f32[8,32], index: 0, kind: input, shape index: {}]
  %s1 = inlined_call_operand.hbm [shape: f32[8,32], index: 1, kind: input, shape index: {}]
  %s2 = inlined_call_operand.vmem [shape: f32[8,1], index: 2, kind: output, shape index: {}]
  %s3 = sld [smem:[#allocation0]]
  $region34: #{tpu_custom_call.1} parent=0
    _
  %s5 = ssub.s32 1, %s3
  %s6 = scalar_select 0, %s5, %s3
  $region1: #{tpu_custom_call.1} parent=0
    #allocation7 [shape = 'u8[4096]{0}', space=vmem, size = 0x1000, scoped, tag = 'input window, operand 0, single buffered']
    #allocation8 [shape = 's32[1]{0}', space=sflag, size = 0x4, scoped, tag = 'scoped memory for tpu_custom_call.1']
    #allocation9 [shape = 'u8[4096]{0}', space=vmem, size = 0x1000, scoped, tag = 'input window, operand 1, single buffered']
    #allocation10 [shape = 's32[1]{0}', space=sflag, size = 0x4, scoped, tag = 'scoped memory for tpu_custom_call.1']
    %7 = vsyncpa [#allocation8], 0
    %8 = vsyncpa [#allocation10], 0
    // Predicated region
    $region2: #{tpu_custom_call.1} parent=1 // pred_check
      _
    $region3: #{tpu_custom_call.1} parent=1 // pred_check_branch
      %10 = sbr.rel (0) target = $region5
    $region4: #{tpu_custom_call.1} parent=1 // pred_region
      %12 = vsyncadd [#allocation8], 0
      %s14 = sshll.u32 %s0, 4
      %s15 = int_to_ptr.hbm [resolvable:$true] %s14
      %s16 = sshll.u32 [#allocation7], 4
      %s17 = int_to_ptr.vmem [resolvable:$true] %s16
      %19 = dma.hbm_to_vmem [thread:$0]  %s15, 128, %s17, [#allocation8]
    $region5: #{tpu_custom_call.1} parent=1 // pred_fallthru
      _
    // Predicated region
    $region6: #{tpu_custom_call.1} parent=1 // pred_check
      _
    $region7: #{tpu_custom_call.1} parent=1 // pred_check_branch
      %21 = sbr.rel (0) target = $region9
    $region8: #{tpu_custom_call.1} parent=1 // pred_region
      %23 = vsyncadd [#allocation10], 0
      %s25 = sshll.u32 %s1, 4
      %s26 = int_to_ptr.hbm [resolvable:$true] %s25
      %s27 = sshll.u32 [#allocation9], 4
      %s28 = int_to_ptr.vmem [resolvable:$true] %s27
      %30 = dma.hbm_to_vmem [thread:$0]  %s26, 128, %s28, [#allocation10]
    $region9: #{tpu_custom_call.1} parent=1 // pred_fallthru
      _
    // Predicated region
    $region10: #{tpu_custom_call.1} parent=1 // pred_check
      _
    $region11: #{tpu_custom_call.1} parent=1 // pred_check_branch
      %32 = sbr.rel (0) target = $region13
    $region12: #{tpu_custom_call.1} parent=1 // pred_region
      %34 = dma.done [#allocation8], 128
    $region13: #{tpu_custom_call.1} parent=1 // pred_fallthru
      _
    // Predicated region
    $region14: #{tpu_custom_call.1} parent=1 // pred_check
      _
    $region15: #{tpu_custom_call.1} parent=1 // pred_check_branch
      %36 = sbr.rel (0) target = $region17
    $region16: #{tpu_custom_call.1} parent=1 // pred_region
      %38 = dma.done [#allocation10], 128
    $region17: #{tpu_custom_call.1} parent=1 // pred_fallthru
      _
    %p39 = scmp.eq.s32.totalorder 0, 0
    // Predicated region
    $region18: #{tpu_custom_call.1} parent=1 // pred_check
      %p40 = pneg %p39
    $region19: #{tpu_custom_call.1} parent=1 // pred_check_branch
      %42 = sbr.rel (%p40) target = $region21
    $region20: #{tpu_custom_call.1} parent=1 // pred_region
      %vm43 = vcmask 7168
      %44 = vst.msk [vmem:[#allocation2] sm:$0xff] %vm43, -inf
      %45 = vst.msk [vmem:[#allocation5] sm:$0xff] %vm43, -inf
      %46 = vst.msk [vmem:[#allocation3] sm:$0xff] %vm43, 0.0
      %47 = vst.msk [vmem:[#allocation6] sm:$0xff] %vm43, 0.0
      %48 = vst.msk [vmem:[#allocation4] sm:$0xff] %vm43, 0.0
    $region21: #{tpu_custom_call.1} parent=1 // pred_fallthru
      _
    %v49 = vld [vmem:[#allocation7] sm:$0xff]
    %v50 = vmul.f32 %v49, 0.33333334
    %v51 = vld [vmem:[#allocation9] sm:$0xff]
    %v52 = vmul.f32 %v51, 0.33333334
    %v53 = vld [vmem:[#allocation2] sm:$0xff]
    %vm54 = vcmask 261120
    %v55 = vsel %vm54, %v52, -inf
    %56 = vmax.xlane.f32.xlu0 %v55
    %v57 = vpop.xlane.xlu0 %56
    %v58 = vmax.f32 %v53, %v57
    %v59 = vsub.f32 %v53, %v58
    %v60 = vmul.f32 %v59, 1.442695
    %v61 = vpow.pop %v60
    %63 = vset.pattern.permute.xlu0 0
    %64 = vperm.xlu0 %63, %v58
    %v65 = vpop.permute.xlu0 %64
    %v67 = vsub.f32 %v52, %v65
    %v68 = vmul.f32 %v67, 1.442695
    %v69 = vpow.pop %v68
    %v70 = vmul.f32 %v69, %v50
    %v71 = vld [vmem:[#allocation3] sm:$0xff]
    %v72 = vmul.f32 %v71, %v61
    %v73 = vsel %vm54, %v69, 0.0
    %74 = vadd.xlane.f32.xlu0 %v73
    %v75 = vpop.xlane.xlu0 %74
    %v76 = vadd.f32 %v72, %v75
    %vm77 = vcmask 7168
    %78 = vst.msk [vmem:[#allocation3] sm:$0xff] %vm77, %v76
    %v79 = vld [vmem:[#allocation4] sm:$0xff]
    %v80 = vmul.f32 %v79, %v61
    %v81 = vsel %vm54, %v70, 0.0
    %82 = vadd.xlane.f32.xlu0 %v81
    %v83 = vpop.xlane.xlu0 %82
    %v84 = vadd.f32 %v80, %v83
    %85 = vst.msk [vmem:[#allocation4] sm:$0xff] %vm77, %v84
    %86 = vst.msk [vmem:[#allocation2] sm:$0xff] %vm77, %v58
    %v87 = vld [vmem:[#allocation5] sm:$0xff]
    %v88 = vsel %vm54, %v50, -inf
    %89 = vmax.xlane.f32.xlu0 %v88
    %v90 = vpop.xlane.xlu0 %89
    %v91 = vmax.f32 %v87, %v90
    %v92 = vsub.f32 %v87, %v91
    %v93 = vmul.f32 %v92, 1.442695
    %v94 = vpow.pop %v93
    %v95 = vld [vmem:[#allocation6] sm:$0xff]
    %v96 = vmul.f32 %v95, %v94
    %98 = vset.pattern.permute.xlu0 0
    %99 = vperm.xlu0 %98, %v91
    %v100 = vpop.permute.xlu0 %99
    %v102 = vsub.f32 %v50, %v100
    %v103 = vmul.f32 %v102, 1.442695
    %v104 = vpow.pop %v103
    %v105 = vsel %vm54, %v104, 0.0
    %106 = vadd.xlane.f32.xlu0 %v105
    %v107 = vpop.xlane.xlu0 %106
    %v108 = vadd.f32 %v96, %v107
    %109 = vst.msk [vmem:[#allocation6] sm:$0xff] %vm77, %v108
    %110 = vst.msk [vmem:[#allocation5] sm:$0xff] %vm77, %v91
    // Predicated region
    $region22: #{tpu_custom_call.1} parent=1 // pred_check
      %p111 = pneg %p39
    $region23: #{tpu_custom_call.1} parent=1 // pred_check_branch
      %113 = sbr.rel (%p111) target = $region25
    $region24: #{tpu_custom_call.1} parent=1 // pred_region
      %v114 = vld [vmem:[#allocation4] sm:$0xff]
      %v115 = vld [vmem:[#allocation3] sm:$0xff]
      %v116 = vrcp.pop %v115
      %v117 = vmul.f32 %v115, %v116
      %v118 = vsub.f32 1.0, %v117
      %v119 = vmul.f32 %v116, %v118
      %v120 = vadd.f32 %v116, %v119
      %vm121 = vweird.f32 %v115
      %vm122 = vweird.f32 %v116
      %vm123 = vmor %vm121, %vm122
      %v124 = vsel %vm123, %v116, %v120
      %v125 = vand.u32 2147483647, %v115
      %vm126 = vcmp.eq.f32.partialorder %v125, 8.507059e+37
      %v127 = vand.u32 %v115, 2147483648
      %v128 = vor.u32 1.1754944e-38, %v127
      %v129 = vsel %vm126, %v128, %v124
      %v130 = vmul.f32 %v114, %v129
      %v131 = vld [vmem:[#allocation5] sm:$0xff]
      %v132 = vld [vmem:[#allocation6] sm:$0xff]
      %v133 = vlog2.pop %v132
      %v134 = vmul.f32 %v133, 0.6931472
      %v135 = vadd.f32 %v131, %v134
      %v136 = vsub.f32 %v130, %v135
      %137 = vst.msk [vmem:[%s2] sm:$0xff] %vm77, %v136
    $region25: #{tpu_custom_call.1} parent=1 // pred_fallthru
      _
    // Predicated region
    $region26: #{tpu_custom_call.1} parent=1 // pred_check
      _
    $region27: #{tpu_custom_call.1} parent=1 // pred_check_branch
      %139 = sbr.rel (0) target = $region29
    $region28: #{tpu_custom_call.1} parent=1 // pred_region
      _
    $region29: #{tpu_custom_call.1} parent=1 // pred_fallthru
      _
    // Predicated region
    $region30: #{tpu_custom_call.1} parent=1 // pred_check
      _
    $region31: #{tpu_custom_call.1} parent=1 // pred_check_branch
      %141 = sbr.rel (0) target = $region33
    $region32: #{tpu_custom_call.1} parent=1 // pred_region
      _
    $region33: #{tpu_custom_call.1} parent=1 // pred_fallthru
      _
    %142 = vsyncpa [#allocation8], 1
    %143 = vsyncpa [#allocation10], 1

</llo_original>
